<compile_context>
chip_gen: v5e
topology: v5e:2x2
jax: 0.10.0
libtpu: 0.0.40
codegen_flags: <defaults>
</compile_context>

<pallas_src>
import functools

import jax
import jax.numpy as jnp
from jax.experimental import pallas as pl
from jax.experimental.pallas import tpu as pltpu

SIGMA = 9.0
_LANES = 128
_ANCHOR_GRAIN = 512            # 512 anchors * 2 coords = 1024 elems = one (8,128) f32 block
_TARGET_TILE_ANCHORS = 131072  # ~1 MiB per input per buffer at f32


def _cdiv(a, b):
    return -(-a // b)


def _round_up(x, m):
    return ((x + m - 1) // m) * m


@functools.lru_cache(maxsize=None)
def _default_num_splits():
    """2 on dual-TensorCore chips (v7x), 1 on single-core v5e/v6e.

    Falls back to 1 (always correct, just unsplit) if the introspection API
    does not expose the core count / chip version on this jax build.
    """
    try:
        info = pltpu.get_tpu_info()
    except Exception:
        return 1
    for attr in ("num_tensorcores", "tensorcore_count", "num_cores", "core_count"):
        v = getattr(info, attr, None)
        if isinstance(v, int) and v >= 1:
            return 2 if v >= 2 else 1
    ver = getattr(info, "chip_version", None)
    if ver is not None and "7" in str(ver):
        return 2
    return 1


def _rpn_regr_loss_kernel(pred_ref, true_ref, sum_ref):
    # Grid = (num_splits [parallel], steps_per_split [arbitrary, reduction]).
    # Output block index is constant along the inner axis -> resident accumulator.
    @pl.when(pl.program_id(1) == 0)
    def _():
        sum_ref[...] = jnp.zeros_like(sum_ref)

    # Unselected / padded anchors arrive with pred == true -> diff == 0 -> loss == 0.
    diff = jnp.abs(true_ref[...] - pred_ref[...])          # (r_blk, 128)

    # Branch-free smooth-L1:
    #   diff <  1/sigma : q = diff     -> 0.5*sigma*diff^2
    #   diff >= 1/sigma : q = 1/sigma  -> diff - 0.5/sigma
    q = jnp.minimum(diff, 1.0 / SIGMA)
    loss = (0.5 * SIGMA) * (q * q) + (diff - q)

    r = loss.shape[0]
    acc_rows = sum_ref.shape[0]
    # Tile-aligned reshape + sum over the major axis == pure VPU vreg adds (no XLU),
    # spread over `acc_rows/8` independent accumulator vreg chains.
    sum_ref[...] += jnp.sum(loss.reshape(r // acc_rows, acc_rows, _LANES), axis=0)


@functools.partial(jax.jit, static_argnames=("num_splits", "target_tile"))
def _rpn_regr_loss_impl(inp, target, *, num_splits, target_tile):
    n = inp.shape[1]

    pred = inp[0].astype(jnp.float32)                      # (N, 2)
    true = target[0, :, 1:3].astype(jnp.float32)           # (N, 2)
    cls = target[0, :, 0]
    sel = cls == 1                                         # exact match, as in PyTorch `cls == 1`

    # Kill unselected anchors at the source: pred := true  =>  diff == 0  =>  zero loss.
    pred = jnp.where(sel[:, None], pred, true)
    # Selected-anchor count on the JAX side (f32 accumulation is exact up to 2^24 anchors).
    num_sel = jnp.sum(sel.astype(jnp.float32))

    # Tiling: derive the tile from N so padding never exceeds _ANCHOR_GRAIN anchors
    # per (split, step) slot, while targeting ~target_tile anchors per step.
    slots = num_splits * max(1, _cdiv(n, num_splits * target_tile))
    steps_per_split = slots // num_splits
    tile_anchors = _round_up(_cdiv(n, slots), _ANCHOR_GRAIN)
    n_pad = tile_anchors * slots

    pad = n_pad - n
    if pad:
        # Padded anchors: pred == true == 0 -> diff == 0 -> contribute nothing.
        pred = jnp.pad(pred, ((0, pad), (0, 0)))
        true = jnp.pad(true, ((0, pad), (0, 0)))

    rows = (n_pad * 2) // _LANES
    r_blk = (tile_anchors * 2) // _LANES                   # rows per grid step (multiple of 8)
    pred_l = pred.reshape(rows, _LANES)                    # row-major interleave, no transpose
    true_l = true.reshape(rows, _LANES)

    # Wider accumulator when the tile allows it (independent add chains; minor v7x win).
    acc_rows = 32 if r_blk % 32 == 0 else (16 if r_blk % 16 == 0 else 8)

    in_map = lambda c, i: (c * steps_per_split + i, 0)
    out_map = lambda c, i: (c, 0)

    sum_out = pl.pallas_call(
        _rpn_regr_loss_kernel,
        out_shape=jax.ShapeDtypeStruct((num_splits * acc_rows, _LANES), jnp.float32),
        grid_spec=pltpu.PrefetchScalarGridSpec(
            num_scalar_prefetch=0,
            grid=(num_splits, steps_per_split),
            in_specs=[
                pl.BlockSpec((r_blk, _LANES), in_map),     # pred (masked)
                pl.BlockSpec((r_blk, _LANES), in_map),     # true
            ],
            out_specs=pl.BlockSpec((acc_rows, _LANES), out_map),
        ),
        compiler_params=pltpu.CompilerParams(
            dimension_semantics=("parallel", "arbitrary")),
    )(pred_l, true_l)

    total = jnp.sum(sum_out)                               # sum of per-element losses
    # Mean over selected anchors; 0.0 if none selected (matches the numel()>0 guard).
    # TODO(synk): the PyTorch try/except fallback (return 0.0 on exception) has no kernel equivalent.
    return jnp.where(num_sel > 0,
                     total / jnp.maximum(num_sel, 1.0),
                     jnp.float32(0.0))


def rpn_regr_loss(inp, target, *, num_splits=None, target_tile_anchors=_TARGET_TILE_ANCHORS):
    """inp: (1, N, 2) predictions; target: (1, N, 3) = (cls, dy, dh)."""
    if num_splits is None:
        num_splits = _default_num_splits()
    return _rpn_regr_loss_impl(inp, target,
                               num_splits=int(num_splits),
                               target_tile=int(target_tile_anchors))


def _reference_loss(inp, target, sigma=SIGMA):
    cls = target[0, :, 0]
    mask = (cls == 1.0).astype(jnp.float32)
    diff = jnp.abs(target[0, :, 1:3] - inp[0])                    # (N, 2)
    less_one = (diff < 1.0 / sigma).astype(jnp.float32)
    loss = less_one * 0.5 * diff ** 2 * sigma + (1.0 - less_one) * (diff - 0.5 / sigma)
    per_anchor = jnp.sum(loss, axis=1)                            # (N,)
    cnt = jnp.sum(mask)
    return jnp.where(cnt > 0, jnp.sum(per_anchor * mask) / jnp.maximum(cnt, 1.0), 0.0)


if __name__ == "__main__":
    key = jax.random.PRNGKey(0)
    k1, k2, k3 = jax.random.split(key, 3)

    N = 1000  # not a multiple of the 512-anchor grain -> exercises padding
    inp = jax.random.normal(k1, (1, N, 2), dtype=jnp.float32)           # predictions
    cls = jax.random.randint(k2, (1, N, 1), -1, 2).astype(jnp.float32)  # cls in {-1, 0, 1}
    regr = jax.random.normal(k3, (1, N, 2), dtype=jnp.float32)
    target = jnp.concatenate([cls, regr], axis=-1)                      # (1, N, 3)

    out = jax.block_until_ready(rpn_regr_loss(inp, target))
    ref = jax.block_until_ready(_reference_loss(inp, target))

    assert jnp.allclose(out, ref, rtol=1e-5, atol=1e-5), (out, ref)
    print("KERNEL_OK")
</pallas_src>

<mosaic_0001>
module attributes {stable_mosaic.version = 11 : i64} {
  func.func @_rpn_regr_loss_kernel(%arg0: i32, %arg1: i32, %arg2: memref<16x128xf32, #tpu.memory_space<vmem>>, %arg3: memref<16x128xf32, #tpu.memory_space<vmem>>, %arg4: memref<16x128xf32, #tpu.memory_space<vmem>>) attributes {dimension_semantics = [#tpu.dimension_semantics<parallel>, #tpu.dimension_semantics<arbitrary>], iteration_bounds = array<i64: 1, 1>, scalar_prefetch = 0 : i64, scratch_operands = 0 : i64, tpu.core_type = #tpu.core_type<tc>, window_params = [{transform_indices = @transform_0, window_bounds = array<i64: 16, 128>}, {transform_indices = @transform_1, window_bounds = array<i64: 16, 128>}, {transform_indices = @transform_2, window_bounds = array<i64: 16, 128>}]} {
    %c0_i32 = arith.constant 0 : i32
    %0 = arith.cmpi eq, %arg1, %c0_i32 : i32
    %1 = arith.extui %0 : i1 to i32
    %c0_i32_0 = arith.constant 0 : i32
    %2 = arith.cmpi ne, %1, %c0_i32_0 : i32
    scf.if %2 {
      %cst_10 = arith.constant 0.000000e+00 : f32
      %19 = vector.broadcast %cst_10 : f32 to vector<16x128xf32>
      %c0_11 = arith.constant 0 : index
      %c0_12 = arith.constant 0 : index
      %20 = vector.load %arg4[%c0_11, %c0_12] : memref<16x128xf32, #tpu.memory_space<vmem>>, vector<16x128xf32>
      tpu.vector_store %arg4[%c0_11, %c0_12], %19 {strides = array<i32>} : memref<16x128xf32, #tpu.memory_space<vmem>>, vector<16x128xf32>,
    } else {
    }
    %c0 = arith.constant 0 : index
    %c0_1 = arith.constant 0 : index
    %3 = vector.load %arg3[%c0, %c0_1] : memref<16x128xf32, #tpu.memory_space<vmem>>, vector<16x128xf32>
    %c0_2 = arith.constant 0 : index
    %c0_3 = arith.constant 0 : index
    %4 = vector.load %arg2[%c0_2, %c0_3] : memref<16x128xf32, #tpu.memory_space<vmem>>, vector<16x128xf32>
    %5 = arith.subf %3, %4 : vector<16x128xf32>
    %6 = math.absf %5 : vector<16x128xf32>
    %cst = arith.constant 0.111111112 : f32
    %7 = vector.broadcast %cst : f32 to vector<16x128xf32>
    %8 = arith.minimumf %6, %7 : vector<16x128xf32>
    %9 = arith.mulf %8, %8 : vector<16x128xf32>
    %cst_4 = arith.constant 4.500000e+00 : f32
    %10 = vector.broadcast %cst_4 : f32 to vector<16x128xf32>
    %11 = arith.mulf %10, %9 : vector<16x128xf32>
    %12 = arith.subf %6, %8 : vector<16x128xf32>
    %13 = arith.addf %11, %12 : vector<16x128xf32>
    %c0_5 = arith.constant 0 : index
    %c0_6 = arith.constant 0 : index
    %14 = vector.load %arg4[%c0_5, %c0_6] : memref<16x128xf32, #tpu.memory_space<vmem>>, vector<16x128xf32>
    %15 = vector.shape_cast %13 : vector<16x128xf32> to vector<1x16x128xf32>
    %cst_7 = arith.constant dense<0.000000e+00> : vector<16x128xf32>
    %16 = vector.multi_reduction <add>, %15, %cst_7 [0] : vector<1x16x128xf32> to vector<16x128xf32>
    %17 = arith.addf %14, %16 : vector<16x128xf32>
    %c0_8 = arith.constant 0 : index
    %c0_9 = arith.constant 0 : index
    %18 = vector.load %arg4[%c0_8, %c0_9] : memref<16x128xf32, #tpu.memory_space<vmem>>, vector<16x128xf32>
    tpu.vector_store %arg4[%c0_8, %c0_9], %17 {strides = array<i32>} : memref<16x128xf32, #tpu.memory_space<vmem>>, vector<16x128xf32>,
    return
  }
  func.func @transform_0(%arg0: i32, %arg1: i32) -> (i32, i32) {
    %c1_i32 = arith.constant 1 : i32
    %0 = arith.muli %arg0, %c1_i32 : i32
    %1 = arith.addi %0, %arg1 : i32
    %c0_i32 = arith.constant 0 : i32
    %c0_i32_0 = arith.constant 0 : i32
    return %1, %c0_i32 : i32, i32
  }
  func.func @transform_1(%arg0: i32, %arg1: i32) -> (i32, i32) {
    %c1_i32 = arith.constant 1 : i32
    %0 = arith.muli %arg0, %c1_i32 : i32
    %1 = arith.addi %0, %arg1 : i32
    %c0_i32 = arith.constant 0 : i32
    %c0_i32_0 = arith.constant 0 : i32
    return %1, %c0_i32 : i32, i32
  }
  func.func @transform_2(%arg0: i32, %arg1: i32) -> (i32, i32) {
    %c0_i32 = arith.constant 0 : i32
    %c0_i32_0 = arith.constant 0 : i32
    return %arg0, %c0_i32 : i32, i32
  }
}

</mosaic_0001>

<llo_original>
// kernel: _rpn_regr_loss_impl.1
$region0: #{_rpn_regr_loss_impl.1}
  #allocation0 [shape = 'u32[]', space=smem, size = 0x4, offset = 0x4, fixed_abs, tag = 'smem constant byte address 0x4 - core index']
  #allocation1 [shape = 'u32[72,128]{1,0:T(1,128)}', space=vmem, size = 0x9000, scoped, tag = 'internal scratch']
  %s0 = inlined_call_operand.vmem [shape: f32[16,128], index: 0, kind: input, shape index: {}]
  %s1 = inlined_call_operand.vmem [shape: f32[16,128], index: 1, kind: input, shape index: {}]
  %s2 = inlined_call_operand.vmem [shape: f32[16,128], index: 2, kind: output, shape index: {}]
  %s3 = sld [smem:[#allocation0]]
  $region22: #{_rpn_regr_loss_impl.1} parent=0
    _
  %s5 = ssub.s32 1, %s3
  %s6 = scalar_select 0, %s5, %s3
  // Predicated region
  $region2: #{_rpn_regr_loss_impl.1} parent=0 // pred_check
    _
  $region3: #{_rpn_regr_loss_impl.1} parent=0 // pred_check_branch
    %8 = sbr.rel (0) target = $region5
  $region4: #{_rpn_regr_loss_impl.1} parent=0 // pred_region
    %s9 = sadd.s32 0, 0
    %s10 = smul.u32 2, %s9
    %p11 = scmp.lt.s32.totalorder %s10, 1
    %s12 = scalar_select %p11, %s10, 1
    %s13 = smul.addr %s12, 8
    %s14 = scalar_lea.vmem %s0, %s13
    %s15 = sadd.s32 0, 0
    %s16 = smul.u32 2, %s15
  $region5: #{_rpn_regr_loss_impl.1} parent=0 // pred_fallthru
    _
  // Predicated region
  $region6: #{_rpn_regr_loss_impl.1} parent=0 // pred_check
    _
  $region7: #{_rpn_regr_loss_impl.1} parent=0 // pred_check_branch
    %18 = sbr.rel (0) target = $region9
  $region8: #{_rpn_regr_loss_impl.1} parent=0 // pred_region
    %s19 = sadd.s32 0, 0
    %s20 = smul.u32 2, %s19
    %p21 = scmp.lt.s32.totalorder %s20, 1
    %s22 = scalar_select %p21, %s20, 1
    %s23 = smul.addr %s22, 8
    %s24 = scalar_lea.vmem %s1, %s23
    %s25 = sadd.s32 0, 0
    %s26 = smul.u32 2, %s25
  $region9: #{_rpn_regr_loss_impl.1} parent=0 // pred_fallthru
    _
  %s27 = sadd.s32 0, 0
  %s28 = smul.u32 2, %s27
  %p29 = scmp.lt.s32.totalorder %s28, 1
  %s30 = scalar_select %p29, %s28, 1
  %s31 = smul.addr %s30, 8
  %s32 = scalar_lea.vmem %s0, %s31
  %s33 = sadd.s32 0, 0
  %s34 = smul.u32 2, %s33
  %p35 = scmp.lt.s32.totalorder %s34, 1
  %s36 = scalar_select %p35, %s34, 1
  %s37 = smul.addr %s36, 8
  %s38 = scalar_lea.vmem %s1, %s37
  %s39 = sadd.s32 0, 0
  %s40 = smul.u32 2, %s39
  %p41 = scmp.lt.s32.totalorder %s40, 1
  %s42 = scalar_select %p41, %s40, 1
  %s43 = smul.addr %s42, 8
  %s44 = scalar_lea.vmem %s0, %s43
  %s45 = sadd.s32 0, 0
  %s46 = smul.u32 2, %s45
  %s47 = sadd.s32 0, 0
  %s48 = smul.u32 2, %s47
  %p49 = scmp.lt.s32.totalorder %s48, 1
  %s50 = scalar_select %p49, %s48, 1
  %s51 = smul.addr %s50, 8
  %s52 = scalar_lea.vmem %s1, %s51
  %s53 = sadd.s32 0, 0
  %s54 = smul.u32 2, %s53
  %p55 = scmp.eq.s32.totalorder 0, 0
  // Predicated region
  $region10: #{_rpn_regr_loss_impl.1} parent=0 // pred_check
    %p56 = pneg %p55
  $region11: #{_rpn_regr_loss_impl.1} parent=0 // pred_check_branch
    %58 = sbr.rel (%p56) target = $region13
  $region12: #{_rpn_regr_loss_impl.1} parent=0 // pred_region
    %59 = vst [vmem:[%s2] sm:$0xff] 0.0
    %60 = vst [vmem:[%s2 + $0x8] sm:$0xff] 0.0
  $region13: #{_rpn_regr_loss_impl.1} parent=0 // pred_fallthru
    _
  %v61 = vld [vmem:[%s52] sm:$0xff]
  %v62 = vld [vmem:[%s52 + $0x8] sm:$0xff]
  %v63 = vld [vmem:[%s44] sm:$0xff]
  %v64 = vld [vmem:[%s44 + $0x8] sm:$0xff]
  %v65 = vsub.f32 %v61, %v63
  %v66 = vsub.f32 %v62, %v64
  %v67 = vand.u32 2147483647, %v65
  %v68 = vand.u32 2147483647, %v66
  %v69 = vmin.f32 %v67, 0.11111111
  %v70 = vmin.f32 %v68, 0.11111111
  %v71 = vmul.f32 %v69, %v69
  %v72 = vmul.f32 %v70, %v70
  %v73 = vmul.f32 %v71, 4.5
  %v74 = vmul.f32 %v72, 4.5
  %v75 = vsub.f32 %v67, %v69
  %v76 = vsub.f32 %v68, %v70
  %v77 = vadd.f32 %v73, %v75
  %v78 = vadd.f32 %v74, %v76
  %v79 = vld [vmem:[%s2] sm:$0xff]
  %v80 = vld [vmem:[%s2 + $0x8] sm:$0xff]
  %v81 = vadd.f32 %v77, 0.0
  %v82 = vadd.f32 %v78, 0.0
  %v83 = vadd.f32 %v79, %v81
  %v84 = vadd.f32 %v80, %v82
  %85 = vst [vmem:[%s2] sm:$0xff] %v83
  %86 = vst [vmem:[%s2 + $0x8] sm:$0xff] %v84
  // Predicated region
  $region14: #{_rpn_regr_loss_impl.1} parent=0 // pred_check
    _
  $region15: #{_rpn_regr_loss_impl.1} parent=0 // pred_check_branch
    %88 = sbr.rel (0) target = $region17
  $region16: #{_rpn_regr_loss_impl.1} parent=0 // pred_region
    _
  $region17: #{_rpn_regr_loss_impl.1} parent=0 // pred_fallthru
    _
  // Predicated region
  $region18: #{_rpn_regr_loss_impl.1} parent=0 // pred_check
    _
  $region19: #{_rpn_regr_loss_impl.1} parent=0 // pred_check_branch
    %90 = sbr.rel (0) target = $region21
  $region20: #{_rpn_regr_loss_impl.1} parent=0 // pred_region
    _
  $region21: #{_rpn_regr_loss_impl.1} parent=0 // pred_fallthru
    _

</llo_original>
